<compile_context>
chip_gen: v6e
topology: v6e:2x2x1
jax: 0.10.0
libtpu: 0.0.40
codegen_flags: <defaults>
</compile_context>

<pallas_src>
import functools

import jax
import jax.numpy as jnp
from jax.experimental import pallas as pl
from jax.experimental.pallas import tpu as pltpu


def mlp_kernel(x_ref, w1_ref, b1_ref, w2_ref, b2_ref, w3_ref, b3_ref, o_ref):
    # fc1 + relu (f32 accumulate regardless of input dtype)
    h1 = jnp.dot(x_ref[...], w1_ref[...], preferred_element_type=jnp.float32)
    h1 = jnp.maximum(h1 + b1_ref[...], 0.0)
    # fc2 + relu
    h2 = jnp.dot(h1.astype(w2_ref.dtype), w2_ref[...],
                 preferred_element_type=jnp.float32)
    h2 = jnp.maximum(h2 + b2_ref[...], 0.0)
    # fc3 (no activation); output columns are zero-padded to a lane-dense width.
    out = jnp.dot(h2.astype(w3_ref.dtype), w3_ref[...],
                  preferred_element_type=jnp.float32) + b3_ref[...]
    o_ref[...] = out.astype(o_ref.dtype)


def _round_up(n, m):
    return ((n + m - 1) // m) * m


@functools.partial(jax.jit, static_argnames=("tb", "use_bf16"))
def net_forward(x, params, *, tb=1024, use_bf16=False):
    """3-layer MLP forward in a single fused Pallas kernel, tiled over the batch."""
    w1, b1, w2, b2, w3, b3 = params
    B, dX = x.shape
    dU = w3.shape[1]

    # --- lane-dense output: pad fc3 to 128 output columns (zeros) -------------
    dU_pad = _round_up(max(dU, 128), 128)
    w3p = jnp.zeros((w3.shape[0], dU_pad), w3.dtype).at[:, :dU].set(w3)
    b3p = jnp.zeros((1, dU_pad), b3.dtype).at[:, :dU].set(b3)

    # --- batch tiling: TB rows per grid step, B padded to a multiple of TB ----
    TB = min(tb, max(8, _round_up(B, 8)))
    TB = _round_up(TB, 8)
    B_pad = _round_up(B, TB)
    if B_pad != B:
        x = jnp.pad(x, ((0, B_pad - B), (0, 0)))

    # --- optional bf16 stream (halves HBM bytes on v6e/v7x); f32 accumulate ---
    stream_dtype = jnp.bfloat16 if use_bf16 else x.dtype
    xk = x.astype(stream_dtype)
    w1k = w1.astype(stream_dtype)
    w2k = w2.astype(stream_dtype)
    w3k = w3p.astype(stream_dtype)

    grid = (B_pad // TB,)
    itemsize = jnp.dtype(stream_dtype).itemsize
    flops = 2 * B_pad * (dX * 60 + 60 * 40 + 40 * dU_pad)
    bytes_accessed = (
        B_pad * dX * itemsize                                   # x stream
        + (dX * 60 + 60 * 40 + 40 * dU_pad) * itemsize          # weights (once)
        + (60 + 40 + dU_pad) * 4                                # biases (once)
        + B_pad * dU_pad * 4                                    # output stream
    )

    out_padded = pl.pallas_call(
        mlp_kernel,
        out_shape=jax.ShapeDtypeStruct((B_pad, dU_pad), jnp.float32),
        grid=grid,
        in_specs=[
            pl.BlockSpec((TB, dX), lambda i: (i, 0)),          # x: streamed per tile
            pl.BlockSpec(w1k.shape, lambda i: (0, 0)),         # weights/biases resident
            pl.BlockSpec(b1.shape, lambda i: (0, 0)),
            pl.BlockSpec(w2k.shape, lambda i: (0, 0)),
            pl.BlockSpec(b2.shape, lambda i: (0, 0)),
            pl.BlockSpec(w3k.shape, lambda i: (0, 0)),
            pl.BlockSpec(b3p.shape, lambda i: (0, 0)),
        ],
        out_specs=pl.BlockSpec((TB, dU_pad), lambda i: (i, 0)),
        compiler_params=pltpu.CompilerParams(
            dimension_semantics=("parallel",)),
        cost_estimate=pl.CostEstimate(
            flops=flops, transcendentals=0, bytes_accessed=bytes_accessed),
    )(xk, w1k, b1, w2k, b2, w3k, b3p)

    return out_padded[:B, :dU]


def init_params(key, dX, dU):
    """Deterministic init mimicking PyTorch's default Linear init U(-1/sqrt(fan_in), +)."""
    ks = jax.random.split(key, 6)

    def linear(kw, kb, fan_in, fan_out):
        bound = 1.0 / jnp.sqrt(jnp.float32(fan_in))
        w = jax.random.uniform(kw, (fan_in, fan_out), jnp.float32, -bound, bound)
        b = jax.random.uniform(kb, (1, fan_out), jnp.float32, -bound, bound)
        return w, b

    w1, b1 = linear(ks[0], ks[1], dX, 60)
    w2, b2 = linear(ks[2], ks[3], 60, 40)
    w3, b3 = linear(ks[4], ks[5], 40, dU)
    return (w1, b1, w2, b2, w3, b3)


def net_forward_ref(x, params):
    w1, b1, w2, b2, w3, b3 = params
    h1 = jnp.maximum(x @ w1 + b1, 0.0)
    h2 = jnp.maximum(h1 @ w2 + b2, 0.0)
    return h2 @ w3 + b3


if __name__ == "__main__":
    dX, dU = 32, 8
    key = jax.random.PRNGKey(0)
    kx, kp, kx2 = jax.random.split(key, 3)
    params = init_params(kp, dX, dU)

    # Small-batch case (original __main__ config): B=2, exercises padding to one tile.
    x_small = jax.random.normal(kx, (2, dX), jnp.float32)
    out_small = jax.block_until_ready(net_forward(x_small, params))
    ref_small = net_forward_ref(x_small, params)
    assert out_small.shape == (2, dU)
    assert jnp.allclose(out_small, ref_small, atol=1e-5, rtol=1e-5)

    # Multi-tile case: B not a multiple of the tile, grid of several batch tiles.
    x_big = jax.random.normal(kx2, (3000, dX), jnp.float32)
    out_big = jax.block_until_ready(net_forward(x_big, params, tb=1024))
    ref_big = net_forward_ref(x_big, params)
    assert out_big.shape == (3000, dU)
    assert jnp.allclose(out_big, ref_big, atol=1e-5, rtol=1e-5)

    # bf16-stream path (v6e/v7x HBM-byte saver), f32 accumulation inside the kernel.
    out_bf16 = jax.block_until_ready(net_forward(x_big, params, tb=1024, use_bf16=True))
    assert jnp.allclose(out_bf16, ref_big, atol=1e-1, rtol=1e-1)

    print("KERNEL_OK")
</pallas_src>

<mosaic_0001>
module attributes {stable_mosaic.version = 11 : i64} {
  func.func @mlp_kernel(%arg0: i32, %arg1: memref<8x32xf32, #tpu.memory_space<vmem>>, %arg2: memref<32x60xf32, #tpu.memory_space<vmem>>, %arg3: memref<1x60xf32, #tpu.memory_space<vmem>>, %arg4: memref<60x40xf32, #tpu.memory_space<vmem>>, %arg5: memref<1x40xf32, #tpu.memory_space<vmem>>, %arg6: memref<40x128xf32, #tpu.memory_space<vmem>>, %arg7: memref<1x128xf32, #tpu.memory_space<vmem>>, %arg8: memref<8x128xf32, #tpu.memory_space<vmem>>) attributes {dimension_semantics = [#tpu.dimension_semantics<parallel>], iteration_bounds = array<i64: 1>, scalar_prefetch = 0 : i64, scratch_operands = 0 : i64, tpu.core_type = #tpu.core_type<tc>, window_params = [{transform_indices = @transform_0, window_bounds = array<i64: 8, 32>}, {pipeline_mode = #tpu.pipeline_mode<synchronous>, transform_indices = @transform_1, window_bounds = array<i64: 32, 60>}, {pipeline_mode = #tpu.pipeline_mode<synchronous>, transform_indices = @transform_2, window_bounds = array<i64: 1, 60>}, {pipeline_mode = #tpu.pipeline_mode<synchronous>, transform_indices = @transform_3, window_bounds = array<i64: 60, 40>}, {pipeline_mode = #tpu.pipeline_mode<synchronous>, transform_indices = @transform_4, window_bounds = array<i64: 1, 40>}, {pipeline_mode = #tpu.pipeline_mode<synchronous>, transform_indices = @transform_5, window_bounds = array<i64: 40, 128>}, {pipeline_mode = #tpu.pipeline_mode<synchronous>, transform_indices = @transform_6, window_bounds = array<i64: 1, 128>}, {transform_indices = @transform_7, window_bounds = array<i64: 8, 128>}]} {
    %c0 = arith.constant 0 : index
    %c0_0 = arith.constant 0 : index
    %0 = vector.load %arg1[%c0, %c0_0] : memref<8x32xf32, #tpu.memory_space<vmem>>, vector<8x32xf32>
    %c0_1 = arith.constant 0 : index
    %c0_2 = arith.constant 0 : index
    %1 = vector.load %arg2[%c0_1, %c0_2] : memref<32x60xf32, #tpu.memory_space<vmem>>, vector<32x60xf32>
    %cst = arith.constant dense<0.000000e+00> : vector<8x60xf32>
    %2 = tpu.matmul %0, %1, %cst {dimension_numbers = #tpu.dot_dimension_numbers<[1], [0], [0], [1], [0, 0, 1, 1], [], []>} : vector<8x32xf32>, vector<32x60xf32>, vector<8x60xf32> -> vector<8x60xf32>
    %c0_3 = arith.constant 0 : index
    %c0_4 = arith.constant 0 : index
    %3 = vector.load %arg3[%c0_3, %c0_4] : memref<1x60xf32, #tpu.memory_space<vmem>>, vector<1x60xf32>
    %4 = vector.broadcast %3 : vector<1x60xf32> to vector<8x60xf32>
    %5 = arith.addf %2, %4 : vector<8x60xf32>
    %cst_5 = arith.constant 0.000000e+00 : f32
    %6 = vector.broadcast %cst_5 : f32 to vector<8x60xf32>
    %7 = arith.maximumf %5, %6 : vector<8x60xf32>
    %c0_6 = arith.constant 0 : index
    %c0_7 = arith.constant 0 : index
    %8 = vector.load %arg4[%c0_6, %c0_7] : memref<60x40xf32, #tpu.memory_space<vmem>>, vector<60x40xf32>
    %cst_8 = arith.constant dense<0.000000e+00> : vector<8x40xf32>
    %9 = tpu.matmul %7, %8, %cst_8 {dimension_numbers = #tpu.dot_dimension_numbers<[1], [0], [0], [1], [0, 0, 1, 1], [], []>} : vector<8x60xf32>, vector<60x40xf32>, vector<8x40xf32> -> vector<8x40xf32>
    %c0_9 = arith.constant 0 : index
    %c0_10 = arith.constant 0 : index
    %10 = vector.load %arg5[%c0_9, %c0_10] : memref<1x40xf32, #tpu.memory_space<vmem>>, vector<1x40xf32>
    %11 = vector.broadcast %10 : vector<1x40xf32> to vector<8x40xf32>
    %12 = arith.addf %9, %11 : vector<8x40xf32>
    %cst_11 = arith.constant 0.000000e+00 : f32
    %13 = vector.broadcast %cst_11 : f32 to vector<8x40xf32>
    %14 = arith.maximumf %12, %13 : vector<8x40xf32>
    %c0_12 = arith.constant 0 : index
    %c0_13 = arith.constant 0 : index
    %15 = vector.load %arg6[%c0_12, %c0_13] : memref<40x128xf32, #tpu.memory_space<vmem>>, vector<40x128xf32>
    %cst_14 = arith.constant dense<0.000000e+00> : vector<8x128xf32>
    %16 = tpu.matmul %14, %15, %cst_14 {dimension_numbers = #tpu.dot_dimension_numbers<[1], [0], [0], [1], [0, 0, 1, 1], [], []>} : vector<8x40xf32>, vector<40x128xf32>, vector<8x128xf32> -> vector<8x128xf32>
    %c0_15 = arith.constant 0 : index
    %c0_16 = arith.constant 0 : index
    %17 = vector.load %arg7[%c0_15, %c0_16] : memref<1x128xf32, #tpu.memory_space<vmem>>, vector<1x128xf32>
    %18 = vector.broadcast %17 : vector<1x128xf32> to vector<8x128xf32>
    %19 = arith.addf %16, %18 : vector<8x128xf32>
    %c0_17 = arith.constant 0 : index
    %c0_18 = arith.constant 0 : index
    %20 = vector.load %arg8[%c0_17, %c0_18] : memref<8x128xf32, #tpu.memory_space<vmem>>, vector<8x128xf32>
    tpu.vector_store %arg8[%c0_17, %c0_18], %19 {strides = array<i32>} : memref<8x128xf32, #tpu.memory_space<vmem>>, vector<8x128xf32>,
    return
  }
  func.func @transform_0(%arg0: i32) -> (i32, i32) {
    %c0_i32 = arith.constant 0 : i32
    %c0_i32_0 = arith.constant 0 : i32
    return %arg0, %c0_i32 : i32, i32
  }
  func.func @transform_1(%arg0: i32) -> (i32, i32) {
    %c0_i32 = arith.constant 0 : i32
    %c0_i32_0 = arith.constant 0 : i32
    %c0_i32_1 = arith.constant 0 : i32
    return %c0_i32, %c0_i32_0 : i32, i32
  }
  func.func @transform_2(%arg0: i32) -> (i32, i32) {
    %c0_i32 = arith.constant 0 : i32
    %c0_i32_0 = arith.constant 0 : i32
    %c0_i32_1 = arith.constant 0 : i32
    return %c0_i32, %c0_i32_0 : i32, i32
  }
  func.func @transform_3(%arg0: i32) -> (i32, i32) {
    %c0_i32 = arith.constant 0 : i32
    %c0_i32_0 = arith.constant 0 : i32
    %c0_i32_1 = arith.constant 0 : i32
    return %c0_i32, %c0_i32_0 : i32, i32
  }
  func.func @transform_4(%arg0: i32) -> (i32, i32) {
    %c0_i32 = arith.constant 0 : i32
    %c0_i32_0 = arith.constant 0 : i32
    %c0_i32_1 = arith.constant 0 : i32
    return %c0_i32, %c0_i32_0 : i32, i32
  }
  func.func @transform_5(%arg0: i32) -> (i32, i32) {
    %c0_i32 = arith.constant 0 : i32
    %c0_i32_0 = arith.constant 0 : i32
    %c0_i32_1 = arith.constant 0 : i32
    return %c0_i32, %c0_i32_0 : i32, i32
  }
  func.func @transform_6(%arg0: i32) -> (i32, i32) {
    %c0_i32 = arith.constant 0 : i32
    %c0_i32_0 = arith.constant 0 : i32
    %c0_i32_1 = arith.constant 0 : i32
    return %c0_i32, %c0_i32_0 : i32, i32
  }
  func.func @transform_7(%arg0: i32) -> (i32, i32) {
    %c0_i32 = arith.constant 0 : i32
    %c0_i32_0 = arith.constant 0 : i32
    return %arg0, %c0_i32 : i32, i32
  }
}

</mosaic_0001>

<llo_original>
// kernel: net_forward.1
$region0: #{net_forward.1}
  #allocation0 [shape = 'u32[]', space=smem, size = 0x4, offset = 0x4, fixed_abs, tag = 'smem constant byte address 0x4 - core index']
  #allocation1 [shape = 'u32[144,128]{1,0:T(1,128)}', space=vmem, size = 0x12000, scoped, tag = 'internal scratch']
  %s0 = inlined_call_operand.vmem [shape: f32[8,32], index: 0, kind: input, shape index: {}]
  %s1 = inlined_call_operand.vmem [shape: f32[32,60], index: 1, kind: input, shape index: {}]
  %s2 = inlined_call_operand.vmem [shape: f32[1,60], index: 2, kind: input, shape index: {}]
  %s3 = inlined_call_operand.vmem [shape: f32[60,40], index: 3, kind: input, shape index: {}]
  %s4 = inlined_call_operand.vmem [shape: f32[1,40], index: 4, kind: input, shape index: {}]
  %s5 = inlined_call_operand.vmem [shape: f32[40,128], index: 5, kind: input, shape index: {}]
  %s6 = inlined_call_operand.vmem [shape: f32[1,128], index: 6, kind: input, shape index: {}]
  %s7 = inlined_call_operand.vmem [shape: f32[8,128], index: 7, kind: output, shape index: {}]
  %s8 = sld [smem:[#allocation0]]
  $region38: #{net_forward.1} parent=0
    _
  %s10 = ssub.s32 1, %s8
  %s11 = scalar_select 0, %s10, %s8
  // Predicated region
  $region2: #{net_forward.1} parent=0 // pred_check
    _
  $region3: #{net_forward.1} parent=0 // pred_check_branch
    %13 = sbr.rel (0) target = $region5
  $region4: #{net_forward.1} parent=0 // pred_region
    _
  $region5: #{net_forward.1} parent=0 // pred_fallthru
    _
  // Predicated region
  $region6: #{net_forward.1} parent=0 // pred_check
    _
  $region7: #{net_forward.1} parent=0 // pred_check_branch
    %15 = sbr.rel (0) target = $region9
  $region8: #{net_forward.1} parent=0 // pred_region
    _
  $region9: #{net_forward.1} parent=0 // pred_fallthru
    _
  // Predicated region
  $region10: #{net_forward.1} parent=0 // pred_check
    _
  $region11: #{net_forward.1} parent=0 // pred_check_branch
    %17 = sbr.rel (0) target = $region13
  $region12: #{net_forward.1} parent=0 // pred_region
    _
  $region13: #{net_forward.1} parent=0 // pred_fallthru
    _
  // Predicated region
  $region14: #{net_forward.1} parent=0 // pred_check
    _
  $region15: #{net_forward.1} parent=0 // pred_check_branch
    %19 = sbr.rel (0) target = $region17
  $region16: #{net_forward.1} parent=0 // pred_region
    _
  $region17: #{net_forward.1} parent=0 // pred_fallthru
    _
  // Predicated region
  $region18: #{net_forward.1} parent=0 // pred_check
    _
  $region19: #{net_forward.1} parent=0 // pred_check_branch
    %21 = sbr.rel (0) target = $region21
  $region20: #{net_forward.1} parent=0 // pred_region
    _
  $region21: #{net_forward.1} parent=0 // pred_fallthru
    _
  // Predicated region
  $region22: #{net_forward.1} parent=0 // pred_check
    _
  $region23: #{net_forward.1} parent=0 // pred_check_branch
    %23 = sbr.rel (0) target = $region25
  $region24: #{net_forward.1} parent=0 // pred_region
    _
  $region25: #{net_forward.1} parent=0 // pred_fallthru
    _
  // Predicated region
  $region26: #{net_forward.1} parent=0 // pred_check
    _
  $region27: #{net_forward.1} parent=0 // pred_check_branch
    %25 = sbr.rel (0) target = $region29
  $region28: #{net_forward.1} parent=0 // pred_region
    _
  $region29: #{net_forward.1} parent=0 // pred_fallthru
    _
  %v26 = vld [vmem:[%s0] sm:$0xff]
  %v27 = vld [vmem:[%s1] sm:$0xff]
  %v28 = vld [vmem:[%s1 + $0x8] sm:$0xff]
  %v29 = vld [vmem:[%s1 + $0x10] sm:$0xff]
  %v30 = vld [vmem:[%s1 + $0x18] sm:$0xff]
  %v31 = vld [vmem:[%s2] sm:$0x1]
  %v33 = vlaneseq
  %v34 = vshrl.u32 %v33, 7
  %v35 = vsub.s32 0, %v34
  %v36 = vrot.slane %v31, %v35
  %vm38 = vcmask 261120
  %v40 = vsel %vm38, %v26, 0
  %42 = vmatprep.subr.mxu0 0.0
  %43 = vmatpush1.msra.mxu0 0.0
  %44 = vmatprep.subr.mxu0 0.0
  %45 = vmatpush1.msra.mxu0 0.0
  %46 = vmatprep.subr.mxu0 0.0
  %47 = vmatpush1.msra.mxu0 0.0
  %48 = vmatprep.subr.mxu0 0.0
  %49 = vmatpush1.msra.mxu0 0.0
  %50 = vmatprep.subr.mxu0 0.0
  %51 = vmatpush1.msra.mxu0 0.0
  %52 = vmatprep.subr.mxu0 0.0
  %53 = vmatpush1.msra.mxu0 0.0
  %54 = vmatprep.subr.mxu0 0.0
  %55 = vmatpush1.msra.mxu0 0.0
  %56 = vmatprep.subr.mxu0 0.0
  %57 = vmatpush1.msra.mxu0 0.0
  %58 = vmatprep.subr.mxu0 0.0
  %59 = vmatpush1.msra.mxu0 0.0
  %60 = vmatprep.subr.mxu0 0.0
  %61 = vmatpush1.msra.mxu0 0.0
  %62 = vmatprep.subr.mxu0 0.0
  %63 = vmatpush1.msra.mxu0 0.0
  %64 = vmatprep.subr.mxu0 0.0
  %65 = vmatpush1.msra.mxu0 0.0
  %66 = vmatprep.subr.mxu0 0.0
  %67 = vmatpush1.msra.mxu0 %v30
  %68 = vmatprep.subr.mxu0 0.0
  %69 = vmatpush1.msra.mxu0 %v29
  %70 = vmatprep.subr.mxu0 0.0
  %71 = vmatpush1.msra.mxu0 %v28
  %72 = vmatprep.subr.mxu0 0.0
  %73 = vmatpush1.msra.mxu0 %v27
  %74 = vmatprep.subr.mxu0 0.0
  %75 = vmatpush2.msra.mxu0 0.0
  %76 = vmatprep.subr.mxu0 0.0
  %77 = vmatpush2.msra.mxu0 0.0
  %78 = vmatprep.subr.mxu0 0.0
  %79 = vmatpush2.msra.mxu0 0.0
  %80 = vmatprep.subr.mxu0 0.0
  %81 = vmatpush2.msra.mxu0 0.0
  %82 = vmatprep.subr.mxu0 0.0
  %83 = vmatpush2.msra.mxu0 0.0
  %84 = vmatprep.subr.mxu0 0.0
  %85 = vmatpush2.msra.mxu0 0.0
  %86 = vmatprep.subr.mxu0 0.0
  %87 = vmatpush2.msra.mxu0 0.0
  %88 = vmatprep.subr.mxu0 0.0
  %89 = vmatpush2.msra.mxu0 0.0
  %90 = vmatprep.subr.mxu0 0.0
  %91 = vmatpush2.msra.mxu0 0.0
  %92 = vmatprep.subr.mxu0 0.0
  %93 = vmatpush2.msra.mxu0 0.0
  %94 = vmatprep.subr.mxu0 0.0
  %95 = vmatpush2.msra.mxu0 0.0
  %96 = vmatprep.subr.mxu0 0.0
  %97 = vmatpush2.msra.mxu0 0.0
  %98 = vmatprep.subr.mxu0 0.0
  %99 = vmatpush2.msra.mxu0 0.0
  %100 = vmatprep.subr.mxu0 0.0
  %101 = vmatpush2.msra.mxu0 0.0
  %102 = vmatprep.subr.mxu0 0.0
  %103 = vmatpush2.msra.mxu0 0.0
  %104 = vmatprep.subr.mxu0 0.0
  %105 = vmatpush2.msra.mxu0 0.0
  %106 = vmatprep.mubr.f32.mxu0 0.0
  %107 = vmatmul.mubr.f32.gmra.mxu0 %v40
  %v108 = vpop.f32.mrf.mxu0
  %v109 = vadd.f32 %v36, %v108
  %v110 = vpop.f32.mrf.mxu0
  %111 = vdwg.mxu0
  %v112 = vmax.f32 %v109, 0.0
  %v113 = vld [vmem:[%s3] sm:$0xff]
  %v114 = vld [vmem:[%s3 + $0x8] sm:$0xff]
  %v115 = vld [vmem:[%s3 + $0x10] sm:$0xff]
  %v116 = vld [vmem:[%s3 + $0x18] sm:$0xff]
  %v117 = vld [vmem:[%s3 + $0x20] sm:$0xff]
  %v118 = vld [vmem:[%s3 + $0x28] sm:$0xff]
  %v119 = vld [vmem:[%s3 + $0x30] sm:$0xff]
  %v120 = vld [vmem:[%s3 + $0x38] sm:$0xf]
  %v121 = vld [vmem:[%s4] sm:$0x1]
  %v123 = vlaneseq
  %v124 = vshrl.u32 %v123, 7
  %v125 = vsub.s32 0, %v124
  %v126 = vrot.slane %v121, %v125
  %vm128 = vcmask 490496
  %v130 = vsel %vm128, %v112, 0
  %vm132 = vcmask 1043456
  %v134 = vsel %vm132, %v120, 0
  %136 = vmatprep.subr.mxu0 0.0
  %137 = vmatpush1.msra.mxu0 0.0
  %138 = vmatprep.subr.mxu0 0.0
  %139 = vmatpush1.msra.mxu0 0.0
  %140 = vmatprep.subr.mxu0 0.0
  %141 = vmatpush1.msra.mxu0 0.0
  %142 = vmatprep.subr.mxu0 0.0
  %143 = vmatpush1.msra.mxu0 0.0
  %144 = vmatprep.subr.mxu0 0.0
  %145 = vmatpush1.msra.mxu0 0.0
  %146 = vmatprep.subr.mxu0 0.0
  %147 = vmatpush1.msra.mxu0 0.0
  %148 = vmatprep.subr.mxu0 0.0
  %149 = vmatpush1.msra.mxu0 0.0
  %150 = vmatprep.subr.mxu0 0.0
  %151 = vmatpush1.msra.mxu0 0.0
  %152 = vmatprep.subr.mxu0 0.0
  %153 = vmatpush1.msra.mxu0 %v134
  %154 = vmatprep.subr.mxu0 0.0
  %155 = vmatpush1.msra.mxu0 %v119
  %156 = vmatprep.subr.mxu0 0.0
  %157 = vmatpush1.msra.mxu0 %v118
  %158 = vmatprep.subr.mxu0 0.0
  %159 = vmatpush1.msra.mxu0 %v117
  %160 = vmatprep.subr.mxu0 0.0
  %161 = vmatpush1.msra.mxu0 %v116
  %162 = vmatprep.subr.mxu0 0.0
  %163 = vmatpush1.msra.mxu0 %v115
  %164 = vmatprep.subr.mxu0 0.0
  %165 = vmatpush1.msra.mxu0 %v114
  %166 = vmatprep.subr.mxu0 0.0
  %167 = vmatpush1.msra.mxu0 %v113
  %168 = vmatprep.subr.mxu0 0.0
  %169 = vmatpush2.msra.mxu0 0.0
  %170 = vmatprep.subr.mxu0 0.0
  %171 = vmatpush2.msra.mxu0 0.0
  %172 = vmatprep.subr.mxu0 0.0
  %173 = vmatpush2.msra.mxu0 0.0
  %174 = vmatprep.subr.mxu0 0.0
  %175 = vmatpush2.msra.mxu0 0.0
  %176 = vmatprep.subr.mxu0 0.0
  %177 = vmatpush2.msra.mxu0 0.0
  %178 = vmatprep.subr.mxu0 0.0
  %179 = vmatpush2.msra.mxu0 0.0
  %180 = vmatprep.subr.mxu0 0.0
  %181 = vmatpush2.msra.mxu0 0.0
  %182 = vmatprep.subr.mxu0 0.0
  %183 = vmatpush2.msra.mxu0 0.0
  %184 = vmatprep.subr.mxu0 0.0
  %185 = vmatpush2.msra.mxu0 0.0
  %186 = vmatprep.subr.mxu0 0.0
  %187 = vmatpush2.msra.mxu0 0.0
  %188 = vmatprep.subr.mxu0 0.0
  %189 = vmatpush2.msra.mxu0 0.0
  %190 = vmatprep.subr.mxu0 0.0
  %191 = vmatpush2.msra.mxu0 0.0
  %192 = vmatprep.subr.mxu0 0.0
  %193 = vmatpush2.msra.mxu0 0.0
  %194 = vmatprep.subr.mxu0 0.0
  %195 = vmatpush2.msra.mxu0 0.0
  %196 = vmatprep.subr.mxu0 0.0
  %197 = vmatpush2.msra.mxu0 0.0
  %198 = vmatprep.subr.mxu0 0.0
  %199 = vmatpush2.msra.mxu0 0.0
  %200 = vmatprep.mubr.f32.mxu0 0.0
  %201 = vmatmul.mubr.f32.gmra.mxu0 %v130
  %v202 = vpop.f32.mrf.mxu0
  %v203 = vadd.f32 %v126, %v202
  %v204 = vpop.f32.mrf.mxu0
  %205 = vdwg.mxu0
  %v206 = vmax.f32 %v203, 0.0
  %v207 = vld [vmem:[%s5] sm:$0xff]
  %v208 = vld [vmem:[%s5 + $0x8] sm:$0xff]
  %v209 = vld [vmem:[%s5 + $0x10] sm:$0xff]
  %v210 = vld [vmem:[%s5 + $0x18] sm:$0xff]
  %v211 = vld [vmem:[%s5 + $0x20] sm:$0xff]
  %v212 = vld [vmem:[%s6] sm:$0x1]
  %v214 = vlaneseq
  %v215 = vshrl.u32 %v214, 7
  %v216 = vsub.s32 0, %v215
  %v217 = vrot.slane %v212, %v216
  %vm219 = vcmask 326656
  %v221 = vsel %vm219, %v206, 0
  %223 = vmatprep.subr.mxu0 0.0
  %224 = vmatpush1.msra.mxu0 0.0
  %225 = vmatprep.subr.mxu0 0.0
  %226 = vmatpush1.msra.mxu0 0.0
  %227 = vmatprep.subr.mxu0 0.0
  %228 = vmatpush1.msra.mxu0 0.0
  %229 = vmatprep.subr.mxu0 0.0
  %230 = vmatpush1.msra.mxu0 0.0
  %231 = vmatprep.subr.mxu0 0.0
  %232 = vmatpush1.msra.mxu0 0.0
  %233 = vmatprep.subr.mxu0 0.0
  %234 = vmatpush1.msra.mxu0 0.0
  %235 = vmatprep.subr.mxu0 0.0
  %236 = vmatpush1.msra.mxu0 0.0
  %237 = vmatprep.subr.mxu0 0.0
  %238 = vmatpush1.msra.mxu0 0.0
  %239 = vmatprep.subr.mxu0 0.0
  %240 = vmatpush1.msra.mxu0 0.0
  %241 = vmatprep.subr.mxu0 0.0
  %242 = vmatpush1.msra.mxu0 0.0
  %243 = vmatprep.subr.mxu0 0.0
  %244 = vmatpush1.msra.mxu0 0.0
  %245 = vmatprep.subr.mxu0 0.0
  %246 = vmatpush1.msra.mxu0 %v211
  %247 = vmatprep.subr.mxu0 0.0
  %248 = vmatpush1.msra.mxu0 %v210
  %249 = vmatprep.subr.mxu0 0.0
  %250 = vmatpush1.msra.mxu0 %v209
  %251 = vmatprep.subr.mxu0 0.0
  %252 = vmatpush1.msra.mxu0 %v208
  %253 = vmatprep.subr.mxu0 0.0
  %254 = vmatpush1.msra.mxu0 %v207
  %255 = vmatprep.subr.mxu0 0.0
  %256 = vmatpush2.msra.mxu0 0.0
  %257 = vmatprep.subr.mxu0 0.0
  %258 = vmatpush2.msra.mxu0 0.0
  %259 = vmatprep.subr.mxu0 0.0
  %260 = vmatpush2.msra.mxu0 0.0
  %261 = vmatprep.subr.mxu0 0.0
  %262 = vmatpush2.msra.mxu0 0.0
  %263 = vmatprep.subr.mxu0 0.0
  %264 = vmatpush2.msra.mxu0 0.0
  %265 = vmatprep.subr.mxu0 0.0
  %266 = vmatpush2.msra.mxu0 0.0
  %267 = vmatprep.subr.mxu0 0.0
  %268 = vmatpush2.msra.mxu0 0.0
  %269 = vmatprep.subr.mxu0 0.0
  %270 = vmatpush2.msra.mxu0 0.0
  %271 = vmatprep.subr.mxu0 0.0
  %272 = vmatpush2.msra.mxu0 0.0
  %273 = vmatprep.subr.mxu0 0.0
  %274 = vmatpush2.msra.mxu0 0.0
  %275 = vmatprep.subr.mxu0 0.0
  %276 = vmatpush2.msra.mxu0 0.0
  %277 = vmatprep.subr.mxu0 0.0
  %278 = vmatpush2.msra.mxu0 0.0
  %279 = vmatprep.subr.mxu0 0.0
  %280 = vmatpush2.msra.mxu0 0.0
  %281 = vmatprep.subr.mxu0 0.0
  %282 = vmatpush2.msra.mxu0 0.0
  %283 = vmatprep.subr.mxu0 0.0
  %284 = vmatpush2.msra.mxu0 0.0
  %285 = vmatprep.subr.mxu0 0.0
  %286 = vmatpush2.msra.mxu0 0.0
  %287 = vmatprep.mubr.f32.mxu0 0.0
  %288 = vmatmul.mubr.f32.gmra.mxu0 %v221
  %v289 = vpop.f32.mrf.mxu0
  %v290 = vadd.f32 %v217, %v289
  %v291 = vpop.f32.mrf.mxu0
  %292 = vdwg.mxu0
  %293 = vst [vmem:[%s7] sm:$0xff] %v290
  // Predicated region
  $region30: #{net_forward.1} parent=0 // pred_check
    _
  $region31: #{net_forward.1} parent=0 // pred_check_branch
    %295 = sbr.rel (0) target = $region33
  $region32: #{net_forward.1} parent=0 // pred_region
    _
  $region33: #{net_forward.1} parent=0 // pred_fallthru
    _
  // Predicated region
  $region34: #{net_forward.1} parent=0 // pred_check
    _
  $region35: #{net_forward.1} parent=0 // pred_check_branch
    %297 = sbr.rel (0) target = $region37
  $region36: #{net_forward.1} parent=0 // pred_region
    _
  $region37: #{net_forward.1} parent=0 // pred_fallthru
    _

</llo_original>
